<compile_context>
chip_gen: v6e
topology: v6e:2x2x1
jax: 0.10.0
libtpu: 0.0.40
codegen_flags: <defaults>
</compile_context>

<pallas_src>
import functools

import jax
import jax.numpy as jnp
from jax.experimental import pallas as pl
from jax.experimental.pallas import tpu as pltpu

hidden_size = 2
input_size = 5
num_classes = 1
num_layers = 1   # single layer only (matches module config)


def _lstm1_kernel(x_ref, wih_ref, whh_ref, b_ref,
                  fc1w_ref, fc1b_ref, fcw_ref, fcb_ref,
                  out_ref, *, T, B):
    # x_ref:   [T*B, I]   (time-major rows: row t*B + b is (time t, batch b))
    # wih_ref: [I, 4H]    (pre-transposed W_ih)
    # whh_ref: [H, 4H]    (pre-transposed W_hh)
    # b_ref:   [1, 4H]    (b_ih + b_hh)
    # fc1w_ref:[H, 128], fc1b_ref:[1, 128]
    # fcw_ref: [128, C], fcb_ref: [1, C]
    # out_ref: [B, C]
    H = whh_ref.shape[0]

    # ---- hoisted input projection: one parallel MXU matmul, off the chain ----
    xw = (jnp.dot(x_ref[...], wih_ref[...], preferred_element_type=jnp.float32)
          + b_ref[...])                                   # [T*B, 4H]

    whh = whh_ref[...]                                    # [H, 4H]

    h = jnp.zeros((B, H), jnp.float32)
    c = jnp.zeros((B, H), jnp.float32)

    # ---- recurrence: fully unrolled (T static), VPU/EUP-only per step -------
    for t in range(T):
        # h @ whh on the VPU: H broadcast multiply/adds (H=2), no MXU latency
        rec = h[:, 0:1] * whh[0:1, :]
        for j in range(1, H):
            rec = rec + h[:, j:j + 1] * whh[j:j + 1, :]
        gates = xw[t * B:(t + 1) * B, :] + rec            # [B, 4H], gate order i,f,g,o

        # two whole-vreg EUP activations instead of four sub-vreg ones
        sg = jax.nn.sigmoid(gates)
        th = jnp.tanh(gates)
        i_g = sg[:, 0 * H:1 * H]
        f_g = sg[:, 1 * H:2 * H]
        g_g = th[:, 2 * H:3 * H]
        o_g = sg[:, 3 * H:4 * H]
        c = f_g * c + i_g * g_g
        h = o_g * jnp.tanh(c)

    # hn.view(-1, H) with num_layers=1 is just [B, H]
    hid = jnp.maximum(h, 0.0)                                          # ReLU
    z = jnp.dot(hid, fc1w_ref[...], preferred_element_type=jnp.float32) + fc1b_ref[...]
    z = jnp.maximum(z, 0.0)                                            # ReLU
    out_ref[...] = (jnp.dot(z, fcw_ref[...], preferred_element_type=jnp.float32)
                    + fcb_ref[...])


@jax.jit
def lstm1_forward(x, params):
    """x: [B, T, I] float32. Returns [B, num_classes] float32."""
    B, T, I = x.shape
    H = params["w_hh"].shape[1]
    C = params["fc_w"].shape[0]

    # Pre-transpose / flatten in plain JAX; under jit these fuse with the call.
    x_flat = jnp.transpose(x, (1, 0, 2)).reshape(T * B, I).astype(jnp.float32)
    wih_t = params["w_ih"].T.astype(jnp.float32)                  # [I, 4H]
    whh_t = params["w_hh"].T.astype(jnp.float32)                  # [H, 4H]
    b = (params["b_ih"] + params["b_hh"]).reshape(1, 4 * H).astype(jnp.float32)
    fc1w_t = params["fc1_w"].T.astype(jnp.float32)                # [H, 128]
    fc1b = params["fc1_b"].reshape(1, -1).astype(jnp.float32)     # [1, 128]
    fcw_t = params["fc_w"].T.astype(jnp.float32)                  # [128, C]
    fcb = params["fc_b"].reshape(1, -1).astype(jnp.float32)       # [1, C]

    vmem = pl.BlockSpec(memory_space=pltpu.MemorySpace.VMEM)
    kernel = functools.partial(_lstm1_kernel, T=T, B=B)
    out = pl.pallas_call(
        kernel,
        out_shape=jax.ShapeDtypeStruct((B, C), jnp.float32),
        in_specs=[vmem] * 8,
        out_specs=vmem,
    )(x_flat, wih_t, whh_t, b, fc1w_t, fc1b, fcw_t, fcb)
    return out


def init_params(key, input_size, hidden_size, num_classes):
    """Deterministic synthetic parameters (PyTorch-shaped)."""
    ks = jax.random.split(key, 8)
    H, I, C = hidden_size, input_size, num_classes
    s = 1.0 / jnp.sqrt(jnp.float32(H))
    u = lambda k, shape, sc: jax.random.uniform(k, shape, jnp.float32, -sc, sc)
    return {
        "w_ih": u(ks[0], (4 * H, I), s),      # nn.LSTM weight_ih_l0
        "w_hh": u(ks[1], (4 * H, H), s),      # nn.LSTM weight_hh_l0
        "b_ih": u(ks[2], (4 * H,), s),        # nn.LSTM bias_ih_l0
        "b_hh": u(ks[3], (4 * H,), s),        # nn.LSTM bias_hh_l0
        "fc1_w": u(ks[4], (128, H), 1.0 / jnp.sqrt(jnp.float32(H))),   # Linear(H,128)
        "fc1_b": u(ks[5], (128,), 1.0 / jnp.sqrt(jnp.float32(H))),
        "fc_w": u(ks[6], (C, 128), 1.0 / jnp.sqrt(128.0)),             # Linear(128,C)
        "fc_b": u(ks[7], (C,), 1.0 / jnp.sqrt(128.0)),
    }


if __name__ == "__main__":
    key = jax.random.PRNGKey(0)
    k_x, k_p = jax.random.split(key)

    batch, seq_length = 2, 8
    x = jax.random.normal(k_x, (batch, seq_length, input_size), jnp.float32)
    params = init_params(k_p, input_size, hidden_size, num_classes)

    out = lstm1_forward(x, params)          # [2, 1]
    jax.block_until_ready(out)

    # Pure-JAX reference for a quick sanity check of the kernel's math.
    def ref(x, p):
        B, T, I = x.shape
        H = p["w_hh"].shape[1]
        h = jnp.zeros((B, H), jnp.float32)
        c = jnp.zeros((B, H), jnp.float32)
        for t in range(T):
            g = x[:, t, :] @ p["w_ih"].T + h @ p["w_hh"].T + p["b_ih"] + p["b_hh"]
            i_g = jax.nn.sigmoid(g[:, 0 * H:1 * H])
            f_g = jax.nn.sigmoid(g[:, 1 * H:2 * H])
            g_g = jnp.tanh(g[:, 2 * H:3 * H])
            o_g = jax.nn.sigmoid(g[:, 3 * H:4 * H])
            c = f_g * c + i_g * g_g
            h = o_g * jnp.tanh(c)
        z = jnp.maximum(jnp.maximum(h, 0.0) @ p["fc1_w"].T + p["fc1_b"], 0.0)
        return z @ p["fc_w"].T + p["fc_b"]

    assert jnp.allclose(out, ref(x, params), atol=1e-5, rtol=1e-5)
    print("KERNEL_OK")
</pallas_src>

<mosaic_0001>
module attributes {stable_mosaic.version = 11 : i64} {
  func.func @_lstm1_kernel(%arg0: memref<16x5xf32, #tpu.memory_space<vmem>>, %arg1: memref<5x8xf32, #tpu.memory_space<vmem>>, %arg2: memref<2x8xf32, #tpu.memory_space<vmem>>, %arg3: memref<1x8xf32, #tpu.memory_space<vmem>>, %arg4: memref<2x128xf32, #tpu.memory_space<vmem>>, %arg5: memref<1x128xf32, #tpu.memory_space<vmem>>, %arg6: memref<128x1xf32, #tpu.memory_space<vmem>>, %arg7: memref<1x1xf32, #tpu.memory_space<vmem>>, %arg8: memref<2x1xf32, #tpu.memory_space<vmem>>) attributes {dimension_semantics = [], scalar_prefetch = 0 : i64, scratch_operands = 0 : i64, tpu.core_type = #tpu.core_type<tc>} {
    %c0 = arith.constant 0 : index
    %c0_0 = arith.constant 0 : index
    %0 = vector.load %arg0[%c0, %c0_0] : memref<16x5xf32, #tpu.memory_space<vmem>>, vector<16x5xf32>
    %c0_1 = arith.constant 0 : index
    %c0_2 = arith.constant 0 : index
    %1 = vector.load %arg1[%c0_1, %c0_2] : memref<5x8xf32, #tpu.memory_space<vmem>>, vector<5x8xf32>
    %cst = arith.constant dense<0.000000e+00> : vector<16x8xf32>
    %2 = tpu.matmul %0, %1, %cst {dimension_numbers = #tpu.dot_dimension_numbers<[1], [0], [0], [1], [0, 0, 1, 1], [], []>} : vector<16x5xf32>, vector<5x8xf32>, vector<16x8xf32> -> vector<16x8xf32>
    %c0_3 = arith.constant 0 : index
    %c0_4 = arith.constant 0 : index
    %3 = vector.load %arg3[%c0_3, %c0_4] : memref<1x8xf32, #tpu.memory_space<vmem>>, vector<1x8xf32>
    %4 = vector.broadcast %3 : vector<1x8xf32> to vector<16x8xf32>
    %5 = arith.addf %2, %4 : vector<16x8xf32>
    %c0_5 = arith.constant 0 : index
    %c0_6 = arith.constant 0 : index
    %6 = vector.load %arg2[%c0_5, %c0_6] : memref<2x8xf32, #tpu.memory_space<vmem>>, vector<2x8xf32>
    %cst_7 = arith.constant 0.000000e+00 : f32
    %7 = vector.broadcast %cst_7 : f32 to vector<2x2xf32>
    %cst_8 = arith.constant 0.000000e+00 : f32
    %8 = vector.broadcast %cst_8 : f32 to vector<2x2xf32>
    %9 = vector.extract_strided_slice %7 {offsets = [0, 0], sizes = [2, 1], strides = [1, 1]} : vector<2x2xf32> to vector<2x1xf32>
    %10 = vector.extract_strided_slice %6 {offsets = [0, 0], sizes = [1, 8], strides = [1, 1]} : vector<2x8xf32> to vector<1x8xf32>
    %11 = vector.broadcast %9 : vector<2x1xf32> to vector<2x8xf32>
    %12 = vector.broadcast %10 : vector<1x8xf32> to vector<2x8xf32>
    %13 = arith.mulf %11, %12 : vector<2x8xf32>
    %14 = vector.extract_strided_slice %7 {offsets = [0, 1], sizes = [2, 1], strides = [1, 1]} : vector<2x2xf32> to vector<2x1xf32>
    %15 = vector.extract_strided_slice %6 {offsets = [1, 0], sizes = [1, 8], strides = [1, 1]} : vector<2x8xf32> to vector<1x8xf32>
    %16 = vector.broadcast %14 : vector<2x1xf32> to vector<2x8xf32>
    %17 = vector.broadcast %15 : vector<1x8xf32> to vector<2x8xf32>
    %18 = arith.mulf %16, %17 : vector<2x8xf32>
    %19 = arith.addf %13, %18 : vector<2x8xf32>
    %20 = vector.extract_strided_slice %5 {offsets = [0, 0], sizes = [2, 8], strides = [1, 1]} : vector<16x8xf32> to vector<2x8xf32>
    %21 = arith.addf %20, %19 : vector<2x8xf32>
    %22 = arith.negf %21 : vector<2x8xf32>
    %23 = math.exp %22 : vector<2x8xf32>
    %cst_9 = arith.constant 1.000000e+00 : f32
    %24 = vector.broadcast %cst_9 : f32 to vector<2x8xf32>
    %25 = arith.addf %24, %23 : vector<2x8xf32>
    %26 = arith.divf %24, %25 : vector<2x8xf32>
    %27 = math.tanh %21 : vector<2x8xf32>
    %28 = vector.extract_strided_slice %26 {offsets = [0, 0], sizes = [2, 2], strides = [1, 1]} : vector<2x8xf32> to vector<2x2xf32>
    %29 = vector.extract_strided_slice %26 {offsets = [0, 2], sizes = [2, 2], strides = [1, 1]} : vector<2x8xf32> to vector<2x2xf32>
    %30 = vector.extract_strided_slice %27 {offsets = [0, 4], sizes = [2, 2], strides = [1, 1]} : vector<2x8xf32> to vector<2x2xf32>
    %31 = vector.extract_strided_slice %26 {offsets = [0, 6], sizes = [2, 2], strides = [1, 1]} : vector<2x8xf32> to vector<2x2xf32>
    %32 = arith.mulf %29, %8 : vector<2x2xf32>
    %33 = arith.mulf %28, %30 : vector<2x2xf32>
    %34 = arith.addf %32, %33 : vector<2x2xf32>
    %35 = math.tanh %34 : vector<2x2xf32>
    %36 = arith.mulf %31, %35 : vector<2x2xf32>
    %37 = vector.extract_strided_slice %36 {offsets = [0, 0], sizes = [2, 1], strides = [1, 1]} : vector<2x2xf32> to vector<2x1xf32>
    %38 = vector.extract_strided_slice %6 {offsets = [0, 0], sizes = [1, 8], strides = [1, 1]} : vector<2x8xf32> to vector<1x8xf32>
    %39 = vector.broadcast %37 : vector<2x1xf32> to vector<2x8xf32>
    %40 = vector.broadcast %38 : vector<1x8xf32> to vector<2x8xf32>
    %41 = arith.mulf %39, %40 : vector<2x8xf32>
    %42 = vector.extract_strided_slice %36 {offsets = [0, 1], sizes = [2, 1], strides = [1, 1]} : vector<2x2xf32> to vector<2x1xf32>
    %43 = vector.extract_strided_slice %6 {offsets = [1, 0], sizes = [1, 8], strides = [1, 1]} : vector<2x8xf32> to vector<1x8xf32>
    %44 = vector.broadcast %42 : vector<2x1xf32> to vector<2x8xf32>
    %45 = vector.broadcast %43 : vector<1x8xf32> to vector<2x8xf32>
    %46 = arith.mulf %44, %45 : vector<2x8xf32>
    %47 = arith.addf %41, %46 : vector<2x8xf32>
    %48 = vector.extract_strided_slice %5 {offsets = [2, 0], sizes = [2, 8], strides = [1, 1]} : vector<16x8xf32> to vector<2x8xf32>
    %49 = arith.addf %48, %47 : vector<2x8xf32>
    %50 = arith.negf %49 : vector<2x8xf32>
    %51 = math.exp %50 : vector<2x8xf32>
    %cst_10 = arith.constant 1.000000e+00 : f32
    %52 = vector.broadcast %cst_10 : f32 to vector<2x8xf32>
    %53 = arith.addf %52, %51 : vector<2x8xf32>
    %54 = arith.divf %52, %53 : vector<2x8xf32>
    %55 = math.tanh %49 : vector<2x8xf32>
    %56 = vector.extract_strided_slice %54 {offsets = [0, 0], sizes = [2, 2], strides = [1, 1]} : vector<2x8xf32> to vector<2x2xf32>
    %57 = vector.extract_strided_slice %54 {offsets = [0, 2], sizes = [2, 2], strides = [1, 1]} : vector<2x8xf32> to vector<2x2xf32>
    %58 = vector.extract_strided_slice %55 {offsets = [0, 4], sizes = [2, 2], strides = [1, 1]} : vector<2x8xf32> to vector<2x2xf32>
    %59 = vector.extract_strided_slice %54 {offsets = [0, 6], sizes = [2, 2], strides = [1, 1]} : vector<2x8xf32> to vector<2x2xf32>
    %60 = arith.mulf %57, %34 : vector<2x2xf32>
    %61 = arith.mulf %56, %58 : vector<2x2xf32>
    %62 = arith.addf %60, %61 : vector<2x2xf32>
    %63 = math.tanh %62 : vector<2x2xf32>
    %64 = arith.mulf %59, %63 : vector<2x2xf32>
    %65 = vector.extract_strided_slice %64 {offsets = [0, 0], sizes = [2, 1], strides = [1, 1]} : vector<2x2xf32> to vector<2x1xf32>
    %66 = vector.extract_strided_slice %6 {offsets = [0, 0], sizes = [1, 8], strides = [1, 1]} : vector<2x8xf32> to vector<1x8xf32>
    %67 = vector.broadcast %65 : vector<2x1xf32> to vector<2x8xf32>
    %68 = vector.broadcast %66 : vector<1x8xf32> to vector<2x8xf32>
    %69 = arith.mulf %67, %68 : vector<2x8xf32>
    %70 = vector.extract_strided_slice %64 {offsets = [0, 1], sizes = [2, 1], strides = [1, 1]} : vector<2x2xf32> to vector<2x1xf32>
    %71 = vector.extract_strided_slice %6 {offsets = [1, 0], sizes = [1, 8], strides = [1, 1]} : vector<2x8xf32> to vector<1x8xf32>
    %72 = vector.broadcast %70 : vector<2x1xf32> to vector<2x8xf32>
    %73 = vector.broadcast %71 : vector<1x8xf32> to vector<2x8xf32>
    %74 = arith.mulf %72, %73 : vector<2x8xf32>
    %75 = arith.addf %69, %74 : vector<2x8xf32>
    %76 = vector.extract_strided_slice %5 {offsets = [4, 0], sizes = [2, 8], strides = [1, 1]} : vector<16x8xf32> to vector<2x8xf32>
    %77 = arith.addf %76, %75 : vector<2x8xf32>
    %78 = arith.negf %77 : vector<2x8xf32>
    %79 = math.exp %78 : vector<2x8xf32>
    %cst_11 = arith.constant 1.000000e+00 : f32
    %80 = vector.broadcast %cst_11 : f32 to vector<2x8xf32>
    %81 = arith.addf %80, %79 : vector<2x8xf32>
    %82 = arith.divf %80, %81 : vector<2x8xf32>
    %83 = math.tanh %77 : vector<2x8xf32>
    %84 = vector.extract_strided_slice %82 {offsets = [0, 0], sizes = [2, 2], strides = [1, 1]} : vector<2x8xf32> to vector<2x2xf32>
    %85 = vector.extract_strided_slice %82 {offsets = [0, 2], sizes = [2, 2], strides = [1, 1]} : vector<2x8xf32> to vector<2x2xf32>
    %86 = vector.extract_strided_slice %83 {offsets = [0, 4], sizes = [2, 2], strides = [1, 1]} : vector<2x8xf32> to vector<2x2xf32>
    %87 = vector.extract_strided_slice %82 {offsets = [0, 6], sizes = [2, 2], strides = [1, 1]} : vector<2x8xf32> to vector<2x2xf32>
    %88 = arith.mulf %85, %62 : vector<2x2xf32>
    %89 = arith.mulf %84, %86 : vector<2x2xf32>
    %90 = arith.addf %88, %89 : vector<2x2xf32>
    %91 = math.tanh %90 : vector<2x2xf32>
    %92 = arith.mulf %87, %91 : vector<2x2xf32>
    %93 = vector.extract_strided_slice %92 {offsets = [0, 0], sizes = [2, 1], strides = [1, 1]} : vector<2x2xf32> to vector<2x1xf32>
    %94 = vector.extract_strided_slice %6 {offsets = [0, 0], sizes = [1, 8], strides = [1, 1]} : vector<2x8xf32> to vector<1x8xf32>
    %95 = vector.broadcast %93 : vector<2x1xf32> to vector<2x8xf32>
    %96 = vector.broadcast %94 : vector<1x8xf32> to vector<2x8xf32>
    %97 = arith.mulf %95, %96 : vector<2x8xf32>
    %98 = vector.extract_strided_slice %92 {offsets = [0, 1], sizes = [2, 1], strides = [1, 1]} : vector<2x2xf32> to vector<2x1xf32>
    %99 = vector.extract_strided_slice %6 {offsets = [1, 0], sizes = [1, 8], strides = [1, 1]} : vector<2x8xf32> to vector<1x8xf32>
    %100 = vector.broadcast %98 : vector<2x1xf32> to vector<2x8xf32>
    %101 = vector.broadcast %99 : vector<1x8xf32> to vector<2x8xf32>
    %102 = arith.mulf %100, %101 : vector<2x8xf32>
    %103 = arith.addf %97, %102 : vector<2x8xf32>
    %104 = vector.extract_strided_slice %5 {offsets = [6, 0], sizes = [2, 8], strides = [1, 1]} : vector<16x8xf32> to vector<2x8xf32>
    %105 = arith.addf %104, %103 : vector<2x8xf32>
    %106 = arith.negf %105 : vector<2x8xf32>
    %107 = math.exp %106 : vector<2x8xf32>
    %cst_12 = arith.constant 1.000000e+00 : f32
    %108 = vector.broadcast %cst_12 : f32 to vector<2x8xf32>
    %109 = arith.addf %108, %107 : vector<2x8xf32>
    %110 = arith.divf %108, %109 : vector<2x8xf32>
    %111 = math.tanh %105 : vector<2x8xf32>
    %112 = vector.extract_strided_slice %110 {offsets = [0, 0], sizes = [2, 2], strides = [1, 1]} : vector<2x8xf32> to vector<2x2xf32>
    %113 = vector.extract_strided_slice %110 {offsets = [0, 2], sizes = [2, 2], strides = [1, 1]} : vector<2x8xf32> to vector<2x2xf32>
    %114 = vector.extract_strided_slice %111 {offsets = [0, 4], sizes = [2, 2], strides = [1, 1]} : vector<2x8xf32> to vector<2x2xf32>
    %115 = vector.extract_strided_slice %110 {offsets = [0, 6], sizes = [2, 2], strides = [1, 1]} : vector<2x8xf32> to vector<2x2xf32>
    %116 = arith.mulf %113, %90 : vector<2x2xf32>
    %117 = arith.mulf %112, %114 : vector<2x2xf32>
    %118 = arith.addf %116, %117 : vector<2x2xf32>
    %119 = math.tanh %118 : vector<2x2xf32>
    %120 = arith.mulf %115, %119 : vector<2x2xf32>
    %121 = vector.extract_strided_slice %120 {offsets = [0, 0], sizes = [2, 1], strides = [1, 1]} : vector<2x2xf32> to vector<2x1xf32>
    %122 = vector.extract_strided_slice %6 {offsets = [0, 0], sizes = [1, 8], strides = [1, 1]} : vector<2x8xf32> to vector<1x8xf32>
    %123 = vector.broadcast %121 : vector<2x1xf32> to vector<2x8xf32>
    %124 = vector.broadcast %122 : vector<1x8xf32> to vector<2x8xf32>
    %125 = arith.mulf %123, %124 : vector<2x8xf32>
    %126 = vector.extract_strided_slice %120 {offsets = [0, 1], sizes = [2, 1], strides = [1, 1]} : vector<2x2xf32> to vector<2x1xf32>
    %127 = vector.extract_strided_slice %6 {offsets = [1, 0], sizes = [1, 8], strides = [1, 1]} : vector<2x8xf32> to vector<1x8xf32>
    %128 = vector.broadcast %126 : vector<2x1xf32> to vector<2x8xf32>
    %129 = vector.broadcast %127 : vector<1x8xf32> to vector<2x8xf32>
    %130 = arith.mulf %128, %129 : vector<2x8xf32>
    %131 = arith.addf %125, %130 : vector<2x8xf32>
    %132 = vector.extract_strided_slice %5 {offsets = [8, 0], sizes = [2, 8], strides = [1, 1]} : vector<16x8xf32> to vector<2x8xf32>
    %133 = arith.addf %132, %131 : vector<2x8xf32>
    %134 = arith.negf %133 : vector<2x8xf32>
    %135 = math.exp %134 : vector<2x8xf32>
    %cst_13 = arith.constant 1.000000e+00 : f32
    %136 = vector.broadcast %cst_13 : f32 to vector<2x8xf32>
    %137 = arith.addf %136, %135 : vector<2x8xf32>
    %138 = arith.divf %136, %137 : vector<2x8xf32>
    %139 = math.tanh %133 : vector<2x8xf32>
    %140 = vector.extract_strided_slice %138 {offsets = [0, 0], sizes = [2, 2], strides = [1, 1]} : vector<2x8xf32> to vector<2x2xf32>
    %141 = vector.extract_strided_slice %138 {offsets = [0, 2], sizes = [2, 2], strides = [1, 1]} : vector<2x8xf32> to vector<2x2xf32>
    %142 = vector.extract_strided_slice %139 {offsets = [0, 4], sizes = [2, 2], strides = [1, 1]} : vector<2x8xf32> to vector<2x2xf32>
    %143 = vector.extract_strided_slice %138 {offsets = [0, 6], sizes = [2, 2], strides = [1, 1]} : vector<2x8xf32> to vector<2x2xf32>
    %144 = arith.mulf %141, %118 : vector<2x2xf32>
    %145 = arith.mulf %140, %142 : vector<2x2xf32>
    %146 = arith.addf %144, %145 : vector<2x2xf32>
    %147 = math.tanh %146 : vector<2x2xf32>
    %148 = arith.mulf %143, %147 : vector<2x2xf32>
    %149 = vector.extract_strided_slice %148 {offsets = [0, 0], sizes = [2, 1], strides = [1, 1]} : vector<2x2xf32> to vector<2x1xf32>
    %150 = vector.extract_strided_slice %6 {offsets = [0, 0], sizes = [1, 8], strides = [1, 1]} : vector<2x8xf32> to vector<1x8xf32>
    %151 = vector.broadcast %149 : vector<2x1xf32> to vector<2x8xf32>
    %152 = vector.broadcast %150 : vector<1x8xf32> to vector<2x8xf32>
    %153 = arith.mulf %151, %152 : vector<2x8xf32>
    %154 = vector.extract_strided_slice %148 {offsets = [0, 1], sizes = [2, 1], strides = [1, 1]} : vector<2x2xf32> to vector<2x1xf32>
    %155 = vector.extract_strided_slice %6 {offsets = [1, 0], sizes = [1, 8], strides = [1, 1]} : vector<2x8xf32> to vector<1x8xf32>
    %156 = vector.broadcast %154 : vector<2x1xf32> to vector<2x8xf32>
    %157 = vector.broadcast %155 : vector<1x8xf32> to vector<2x8xf32>
    %158 = arith.mulf %156, %157 : vector<2x8xf32>
    %159 = arith.addf %153, %158 : vector<2x8xf32>
    %160 = vector.extract_strided_slice %5 {offsets = [10, 0], sizes = [2, 8], strides = [1, 1]} : vector<16x8xf32> to vector<2x8xf32>
    %161 = arith.addf %160, %159 : vector<2x8xf32>
    %162 = arith.negf %161 : vector<2x8xf32>
    %163 = math.exp %162 : vector<2x8xf32>
    %cst_14 = arith.constant 1.000000e+00 : f32
    %164 = vector.broadcast %cst_14 : f32 to vector<2x8xf32>
    %165 = arith.addf %164, %163 : vector<2x8xf32>
    %166 = arith.divf %164, %165 : vector<2x8xf32>
    %167 = math.tanh %161 : vector<2x8xf32>
    %168 = vector.extract_strided_slice %166 {offsets = [0, 0], sizes = [2, 2], strides = [1, 1]} : vector<2x8xf32> to vector<2x2xf32>
    %169 = vector.extract_strided_slice %166 {offsets = [0, 2], sizes = [2, 2], strides = [1, 1]} : vector<2x8xf32> to vector<2x2xf32>
    %170 = vector.extract_strided_slice %167 {offsets = [0, 4], sizes = [2, 2], strides = [1, 1]} : vector<2x8xf32> to vector<2x2xf32>
    %171 = vector.extract_strided_slice %166 {offsets = [0, 6], sizes = [2, 2], strides = [1, 1]} : vector<2x8xf32> to vector<2x2xf32>
    %172 = arith.mulf %169, %146 : vector<2x2xf32>
    %173 = arith.mulf %168, %170 : vector<2x2xf32>
    %174 = arith.addf %172, %173 : vector<2x2xf32>
    %175 = math.tanh %174 : vector<2x2xf32>
    %176 = arith.mulf %171, %175 : vector<2x2xf32>
    %177 = vector.extract_strided_slice %176 {offsets = [0, 0], sizes = [2, 1], strides = [1, 1]} : vector<2x2xf32> to vector<2x1xf32>
    %178 = vector.extract_strided_slice %6 {offsets = [0, 0], sizes = [1, 8], strides = [1, 1]} : vector<2x8xf32> to vector<1x8xf32>
    %179 = vector.broadcast %177 : vector<2x1xf32> to vector<2x8xf32>
    %180 = vector.broadcast %178 : vector<1x8xf32> to vector<2x8xf32>
    %181 = arith.mulf %179, %180 : vector<2x8xf32>
    %182 = vector.extract_strided_slice %176 {offsets = [0, 1], sizes = [2, 1], strides = [1, 1]} : vector<2x2xf32> to vector<2x1xf32>
    %183 = vector.extract_strided_slice %6 {offsets = [1, 0], sizes = [1, 8], strides = [1, 1]} : vector<2x8xf32> to vector<1x8xf32>
    %184 = vector.broadcast %182 : vector<2x1xf32> to vector<2x8xf32>
    %185 = vector.broadcast %183 : vector<1x8xf32> to vector<2x8xf32>
    %186 = arith.mulf %184, %185 : vector<2x8xf32>
    %187 = arith.addf %181, %186 : vector<2x8xf32>
    %188 = vector.extract_strided_slice %5 {offsets = [12, 0], sizes = [2, 8], strides = [1, 1]} : vector<16x8xf32> to vector<2x8xf32>
    %189 = arith.addf %188, %187 : vector<2x8xf32>
    %190 = arith.negf %189 : vector<2x8xf32>
    %191 = math.exp %190 : vector<2x8xf32>
    %cst_15 = arith.constant 1.000000e+00 : f32
    %192 = vector.broadcast %cst_15 : f32 to vector<2x8xf32>
    %193 = arith.addf %192, %191 : vector<2x8xf32>
    %194 = arith.divf %192, %193 : vector<2x8xf32>
    %195 = math.tanh %189 : vector<2x8xf32>
    %196 = vector.extract_strided_slice %194 {offsets = [0, 0], sizes = [2, 2], strides = [1, 1]} : vector<2x8xf32> to vector<2x2xf32>
    %197 = vector.extract_strided_slice %194 {offsets = [0, 2], sizes = [2, 2], strides = [1, 1]} : vector<2x8xf32> to vector<2x2xf32>
    %198 = vector.extract_strided_slice %195 {offsets = [0, 4], sizes = [2, 2], strides = [1, 1]} : vector<2x8xf32> to vector<2x2xf32>
    %199 = vector.extract_strided_slice %194 {offsets = [0, 6], sizes = [2, 2], strides = [1, 1]} : vector<2x8xf32> to vector<2x2xf32>
    %200 = arith.mulf %197, %174 : vector<2x2xf32>
    %201 = arith.mulf %196, %198 : vector<2x2xf32>
    %202 = arith.addf %200, %201 : vector<2x2xf32>
    %203 = math.tanh %202 : vector<2x2xf32>
    %204 = arith.mulf %199, %203 : vector<2x2xf32>
    %205 = vector.extract_strided_slice %204 {offsets = [0, 0], sizes = [2, 1], strides = [1, 1]} : vector<2x2xf32> to vector<2x1xf32>
    %206 = vector.extract_strided_slice %6 {offsets = [0, 0], sizes = [1, 8], strides = [1, 1]} : vector<2x8xf32> to vector<1x8xf32>
    %207 = vector.broadcast %205 : vector<2x1xf32> to vector<2x8xf32>
    %208 = vector.broadcast %206 : vector<1x8xf32> to vector<2x8xf32>
    %209 = arith.mulf %207, %208 : vector<2x8xf32>
    %210 = vector.extract_strided_slice %204 {offsets = [0, 1], sizes = [2, 1], strides = [1, 1]} : vector<2x2xf32> to vector<2x1xf32>
    %211 = vector.extract_strided_slice %6 {offsets = [1, 0], sizes = [1, 8], strides = [1, 1]} : vector<2x8xf32> to vector<1x8xf32>
    %212 = vector.broadcast %210 : vector<2x1xf32> to vector<2x8xf32>
    %213 = vector.broadcast %211 : vector<1x8xf32> to vector<2x8xf32>
    %214 = arith.mulf %212, %213 : vector<2x8xf32>
    %215 = arith.addf %209, %214 : vector<2x8xf32>
    %216 = vector.extract_strided_slice %5 {offsets = [14, 0], sizes = [2, 8], strides = [1, 1]} : vector<16x8xf32> to vector<2x8xf32>
    %217 = arith.addf %216, %215 : vector<2x8xf32>
    %218 = arith.negf %217 : vector<2x8xf32>
    %219 = math.exp %218 : vector<2x8xf32>
    %cst_16 = arith.constant 1.000000e+00 : f32
    %220 = vector.broadcast %cst_16 : f32 to vector<2x8xf32>
    %221 = arith.addf %220, %219 : vector<2x8xf32>
    %222 = arith.divf %220, %221 : vector<2x8xf32>
    %223 = math.tanh %217 : vector<2x8xf32>
    %224 = vector.extract_strided_slice %222 {offsets = [0, 0], sizes = [2, 2], strides = [1, 1]} : vector<2x8xf32> to vector<2x2xf32>
    %225 = vector.extract_strided_slice %222 {offsets = [0, 2], sizes = [2, 2], strides = [1, 1]} : vector<2x8xf32> to vector<2x2xf32>
    %226 = vector.extract_strided_slice %223 {offsets = [0, 4], sizes = [2, 2], strides = [1, 1]} : vector<2x8xf32> to vector<2x2xf32>
    %227 = vector.extract_strided_slice %222 {offsets = [0, 6], sizes = [2, 2], strides = [1, 1]} : vector<2x8xf32> to vector<2x2xf32>
    %228 = arith.mulf %225, %202 : vector<2x2xf32>
    %229 = arith.mulf %224, %226 : vector<2x2xf32>
    %230 = arith.addf %228, %229 : vector<2x2xf32>
    %231 = math.tanh %230 : vector<2x2xf32>
    %232 = arith.mulf %227, %231 : vector<2x2xf32>
    %cst_17 = arith.constant 0.000000e+00 : f32
    %233 = vector.broadcast %cst_17 : f32 to vector<2x2xf32>
    %234 = arith.maximumf %232, %233 : vector<2x2xf32>
    %c0_18 = arith.constant 0 : index
    %c0_19 = arith.constant 0 : index
    %235 = vector.load %arg4[%c0_18, %c0_19] : memref<2x128xf32, #tpu.memory_space<vmem>>, vector<2x128xf32>
    %cst_20 = arith.constant dense<0.000000e+00> : vector<2x128xf32>
    %236 = tpu.matmul %234, %235, %cst_20 {dimension_numbers = #tpu.dot_dimension_numbers<[1], [0], [0], [1], [0, 0, 1, 1], [], []>} : vector<2x2xf32>, vector<2x128xf32>, vector<2x128xf32> -> vector<2x128xf32>
    %c0_21 = arith.constant 0 : index
    %c0_22 = arith.constant 0 : index
    %237 = vector.load %arg5[%c0_21, %c0_22] : memref<1x128xf32, #tpu.memory_space<vmem>>, vector<1x128xf32>
    %238 = vector.broadcast %237 : vector<1x128xf32> to vector<2x128xf32>
    %239 = arith.addf %236, %238 : vector<2x128xf32>
    %cst_23 = arith.constant 0.000000e+00 : f32
    %240 = vector.broadcast %cst_23 : f32 to vector<2x128xf32>
    %241 = arith.maximumf %239, %240 : vector<2x128xf32>
    %c0_24 = arith.constant 0 : index
    %c0_25 = arith.constant 0 : index
    %242 = vector.load %arg6[%c0_24, %c0_25] : memref<128x1xf32, #tpu.memory_space<vmem>>, vector<128x1xf32>
    %cst_26 = arith.constant dense<0.000000e+00> : vector<2x1xf32>
    %243 = tpu.matmul %241, %242, %cst_26 {dimension_numbers = #tpu.dot_dimension_numbers<[1], [0], [0], [1], [0, 0, 1, 1], [], []>} : vector<2x128xf32>, vector<128x1xf32>, vector<2x1xf32> -> vector<2x1xf32>
    %c0_27 = arith.constant 0 : index
    %c0_28 = arith.constant 0 : index
    %244 = vector.load %arg7[%c0_27, %c0_28] : memref<1x1xf32, #tpu.memory_space<vmem>>, vector<1x1xf32>
    %245 = vector.broadcast %244 : vector<1x1xf32> to vector<2x1xf32>
    %246 = arith.addf %243, %245 : vector<2x1xf32>
    %c0_29 = arith.constant 0 : index
    %c0_30 = arith.constant 0 : index
    %247 = vector.load %arg8[%c0_29, %c0_30] : memref<2x1xf32, #tpu.memory_space<vmem>>, vector<2x1xf32>
    tpu.vector_store %arg8[%c0_29, %c0_30], %246 {strides = array<i32>} : memref<2x1xf32, #tpu.memory_space<vmem>>, vector<2x1xf32>,
    return
  }
}

</mosaic_0001>

<llo_original>
// kernel: lstm1_forward.1
$region0: #{lstm1_forward.1}
  #allocation0 [shape = 'u32[]', space=smem, size = 0x4, offset = 0x4, fixed_abs, tag = 'smem constant byte address 0x4 - core index']
  #allocation1 [shape = 'u32[144,128]{1,0:T(1,128)}', space=vmem, size = 0x12000, scoped, tag = 'internal scratch']
  #allocation2 [shape = 'f32[1,1]{1,0:T(1,128)S(1)}', space=vmem, size = 0x200, scoped, tag = 'scoped memory for lstm1_forward.1']
  %s0 = inlined_call_operand.vmem [shape: f32[16,5], index: 0, kind: input, shape index: {}]
  %s1 = inlined_call_operand.vmem [shape: f32[5,8], index: 1, kind: input, shape index: {}]
  %s2 = inlined_call_operand.vmem [shape: f32[2,8], index: 2, kind: input, shape index: {}]
  %s3 = inlined_call_operand.vmem [shape: f32[1,8], index: 3, kind: input, shape index: {}]
  %s4 = inlined_call_operand.vmem [shape: f32[2,128], index: 4, kind: input, shape index: {}]
  %s5 = inlined_call_operand.vmem [shape: f32[1,128], index: 5, kind: input, shape index: {}]
  %s6 = inlined_call_operand.vmem [shape: f32[128,1], index: 6, kind: input, shape index: {}]
  %s7 = inlined_call_operand.<no memory space> [shape: f32[1,1], index: 7, kind: input, shape index: {}]
  %s8 = inlined_call_operand.vmem [shape: f32[2,1], index: 8, kind: output, shape index: {}]
  %s9 = sld [smem:[#allocation0]]
  $region42: #{lstm1_forward.1} parent=0
    _
  %s11 = ssub.s32 1, %s9
  %s12 = scalar_select 0, %s11, %s9
  %v13 = vstv %s7
  %14 = vst [vmem:[#allocation2] sm:$0x1] %v13
  // Predicated region
  $region2: #{lstm1_forward.1} parent=0 // pred_check
    _
  $region3: #{lstm1_forward.1} parent=0 // pred_check_branch
    %16 = sbr.rel (0) target = $region5
  $region4: #{lstm1_forward.1} parent=0 // pred_region
    _
  $region5: #{lstm1_forward.1} parent=0 // pred_fallthru
    _
  // Predicated region
  $region6: #{lstm1_forward.1} parent=0 // pred_check
    _
  $region7: #{lstm1_forward.1} parent=0 // pred_check_branch
    %18 = sbr.rel (0) target = $region9
  $region8: #{lstm1_forward.1} parent=0 // pred_region
    _
  $region9: #{lstm1_forward.1} parent=0 // pred_fallthru
    _
  // Predicated region
  $region10: #{lstm1_forward.1} parent=0 // pred_check
    _
  $region11: #{lstm1_forward.1} parent=0 // pred_check_branch
    %20 = sbr.rel (0) target = $region13
  $region12: #{lstm1_forward.1} parent=0 // pred_region
    _
  $region13: #{lstm1_forward.1} parent=0 // pred_fallthru
    _
  // Predicated region
  $region14: #{lstm1_forward.1} parent=0 // pred_check
    _
  $region15: #{lstm1_forward.1} parent=0 // pred_check_branch
    %22 = sbr.rel (0) target = $region17
  $region16: #{lstm1_forward.1} parent=0 // pred_region
    _
  $region17: #{lstm1_forward.1} parent=0 // pred_fallthru
    _
  // Predicated region
  $region18: #{lstm1_forward.1} parent=0 // pred_check
    _
  $region19: #{lstm1_forward.1} parent=0 // pred_check_branch
    %24 = sbr.rel (0) target = $region21
  $region20: #{lstm1_forward.1} parent=0 // pred_region
    _
  $region21: #{lstm1_forward.1} parent=0 // pred_fallthru
    _
  // Predicated region
  $region22: #{lstm1_forward.1} parent=0 // pred_check
    _
  $region23: #{lstm1_forward.1} parent=0 // pred_check_branch
    %26 = sbr.rel (0) target = $region25
  $region24: #{lstm1_forward.1} parent=0 // pred_region
    _
  $region25: #{lstm1_forward.1} parent=0 // pred_fallthru
    _
  // Predicated region
  $region26: #{lstm1_forward.1} parent=0 // pred_check
    _
  $region27: #{lstm1_forward.1} parent=0 // pred_check_branch
    %28 = sbr.rel (0) target = $region29
  $region28: #{lstm1_forward.1} parent=0 // pred_region
    _
  $region29: #{lstm1_forward.1} parent=0 // pred_fallthru
    _
  // Predicated region
  $region30: #{lstm1_forward.1} parent=0 // pred_check
    _
  $region31: #{lstm1_forward.1} parent=0 // pred_check_branch
    %30 = sbr.rel (0) target = $region33
  $region32: #{lstm1_forward.1} parent=0 // pred_region
    _
  $region33: #{lstm1_forward.1} parent=0 // pred_fallthru
    _
  %v31 = vld [vmem:[%s0] sm:$0xff]
  %v32 = vld [vmem:[%s0 + $0x8] sm:$0xff]
  %v33 = vld [vmem:[%s1] sm:$0x1f]
  %v34 = vld [vmem:[%s3] sm:$0x1]
  %v36 = vlaneseq
  %v37 = vshrl.u32 %v36, 7
  %v38 = vsub.s32 0, %v37
  %v39 = vrot.slane %v34, %v38
  %vm41 = vcmask 39936
  %v43 = vsel %vm41, %v31, 0
  %v46 = vsel %vm41, %v32, 0
  %vm48 = vcmask 1044480
  %v50 = vsel %vm48, %v33, 0
  %52 = vmatprep.subr.mxu0 0.0
  %53 = vmatpush1.msra.mxu0 0.0
  %54 = vmatprep.subr.mxu0 0.0
  %55 = vmatpush1.msra.mxu0 0.0
  %56 = vmatprep.subr.mxu0 0.0
  %57 = vmatpush1.msra.mxu0 0.0
  %58 = vmatprep.subr.mxu0 0.0
  %59 = vmatpush1.msra.mxu0 0.0
  %60 = vmatprep.subr.mxu0 0.0
  %61 = vmatpush1.msra.mxu0 0.0
  %62 = vmatprep.subr.mxu0 0.0
  %63 = vmatpush1.msra.mxu0 0.0
  %64 = vmatprep.subr.mxu0 0.0
  %65 = vmatpush1.msra.mxu0 0.0
  %66 = vmatprep.subr.mxu0 0.0
  %67 = vmatpush1.msra.mxu0 0.0
  %68 = vmatprep.subr.mxu0 0.0
  %69 = vmatpush1.msra.mxu0 0.0
  %70 = vmatprep.subr.mxu0 0.0
  %71 = vmatpush1.msra.mxu0 0.0
  %72 = vmatprep.subr.mxu0 0.0
  %73 = vmatpush1.msra.mxu0 0.0
  %74 = vmatprep.subr.mxu0 0.0
  %75 = vmatpush1.msra.mxu0 0.0
  %76 = vmatprep.subr.mxu0 0.0
  %77 = vmatpush1.msra.mxu0 0.0
  %78 = vmatprep.subr.mxu0 0.0
  %79 = vmatpush1.msra.mxu0 0.0
  %80 = vmatprep.subr.mxu0 0.0
  %81 = vmatpush1.msra.mxu0 0.0
  %82 = vmatprep.subr.mxu0 0.0
  %83 = vmatpush1.msra.mxu0 %v50
  %84 = vmatprep.subr.mxu0 0.0
  %85 = vmatpush2.msra.mxu0 0.0
  %86 = vmatprep.subr.mxu0 0.0
  %87 = vmatpush2.msra.mxu0 0.0
  %88 = vmatprep.subr.mxu0 0.0
  %89 = vmatpush2.msra.mxu0 0.0
  %90 = vmatprep.subr.mxu0 0.0
  %91 = vmatpush2.msra.mxu0 0.0
  %92 = vmatprep.subr.mxu0 0.0
  %93 = vmatpush2.msra.mxu0 0.0
  %94 = vmatprep.subr.mxu0 0.0
  %95 = vmatpush2.msra.mxu0 0.0
  %96 = vmatprep.subr.mxu0 0.0
  %97 = vmatpush2.msra.mxu0 0.0
  %98 = vmatprep.subr.mxu0 0.0
  %99 = vmatpush2.msra.mxu0 0.0
  %100 = vmatprep.subr.mxu0 0.0
  %101 = vmatpush2.msra.mxu0 0.0
  %102 = vmatprep.subr.mxu0 0.0
  %103 = vmatpush2.msra.mxu0 0.0
  %104 = vmatprep.subr.mxu0 0.0
  %105 = vmatpush2.msra.mxu0 0.0
  %106 = vmatprep.subr.mxu0 0.0
  %107 = vmatpush2.msra.mxu0 0.0
  %108 = vmatprep.subr.mxu0 0.0
  %109 = vmatpush2.msra.mxu0 0.0
  %110 = vmatprep.subr.mxu0 0.0
  %111 = vmatpush2.msra.mxu0 0.0
  %112 = vmatprep.subr.mxu0 0.0
  %113 = vmatpush2.msra.mxu0 0.0
  %114 = vmatprep.subr.mxu0 0.0
  %115 = vmatpush2.msra.mxu0 0.0
  %116 = vmatprep.mubr.f32.mxu0 0.0
  %117 = vmatmul.mubr.f32.gmra.mxu0 %v43
  %v118 = vpop.f32.mrf.mxu0
  %v119 = vadd.f32 %v39, %v118
  %v120 = vpop.f32.mrf.mxu0
  %121 = vmatprep.mubr.f32.mxu0 0.0
  %122 = vmatmul.mubr.f32.gmra.mxu0 %v46
  %v123 = vpop.f32.mrf.mxu0
  %v124 = vadd.f32 %v39, %v123
  %v125 = vpop.f32.mrf.mxu0
  %126 = vdwg.mxu0
  %v127 = vld [vmem:[%s2] sm:$0x3]
  %v128 = vlaneseq
  %v129 = vshrl.u32 %v128, 7
  %v130 = vsub.s32 0, %v129
  %v131 = vrot.slane %v127, %v130
  %v132 = vmul.f32 %v131, 0.0
  %v133 = vlaneseq
  %v134 = vshrl.u32 %v133, 7
  %v135 = vsub.s32 1, %v134
  %v136 = vrot.slane %v127, %v135
  %v137 = vmul.f32 %v136, 0.0
  %v138 = vadd.f32 %v132, %v137
  %v139 = vadd.f32 %v119, %v138
  %v140 = vxor.u32 %v139, 2147483648
  %v141 = vmul.f32 %v140, 1.442695
  %v142 = vpow.pop %v141
  %v143 = vadd.f32 %v142, 1.0
  %v144 = vrcp.pop %v143
  %v145 = vmul.f32 1.0, %v144
  %v146 = vtanh.pop %v139
  %v147 = vmul.f32 %v145, 0.0
  %149 = vrot.lane.b32.xlu0 %v146, 124
  %v150 = vpop.permute.xlu0 %149
  %v152 = vmul.f32 %v145, %v150
  %154 = vrot.lane.b32.xlu0 %v152, 2
  %v155 = vpop.permute.xlu0 %154
  %v157 = vadd.f32 %v147, %v155
  %v158 = vtanh.pop %v157
  %160 = vrot.lane.b32.xlu0 %v158, 4
  %v161 = vpop.permute.xlu0 %160
  %v163 = vmul.f32 %v145, %v161
  %165 = vset.pattern.permute.xlu0 6
  %166 = vperm.xlu0 %165, %v163
  %v167 = vpop.permute.xlu0 %166
  %v169 = vmul.f32 %v167, %v131
  %170 = vset.pattern.permute.xlu0 7
  %171 = vperm.xlu0 %170, %v163
  %v172 = vpop.permute.xlu0 %171
  %v174 = vmul.f32 %v172, %v136
  %v175 = vadd.f32 %v169, %v174
  %v177 = vrot.slane %v175, 6
  %v179 = vadd.f32 %v119, %v177
  %v180 = vxor.u32 %v179, 2147483648
  %v181 = vmul.f32 %v180, 1.442695
  %v182 = vpow.pop %v181
  %v183 = vadd.f32 %v182, 1.0
  %v184 = vrcp.pop %v183
  %v185 = vmul.f32 1.0, %v184
  %v186 = vtanh.pop %v179
  %v188 = vrot.slane %v157, 6
  %v190 = vmul.f32 %v185, %v188
  %192 = vrot.lane.b32.xlu0 %v186, 124
  %v193 = vpop.permute.xlu0 %192
  %v195 = vmul.f32 %v185, %v193
  %197 = vrot.lane.b32.xlu0 %v195, 2
  %v198 = vpop.permute.xlu0 %197
  %v200 = vadd.f32 %v190, %v198
  %v201 = vtanh.pop %v200
  %203 = vrot.lane.b32.xlu0 %v201, 4
  %v204 = vpop.permute.xlu0 %203
  %v206 = vmul.f32 %v185, %v204
  %208 = vset.pattern.permute.xlu0 6
  %209 = vperm.xlu0 %208, %v206
  %v210 = vpop.permute.xlu0 %209
  %v212 = vmul.f32 %v210, %v131
  %213 = vset.pattern.permute.xlu0 7
  %214 = vperm.xlu0 %213, %v206
  %v215 = vpop.permute.xlu0 %214
  %v217 = vmul.f32 %v215, %v136
  %v218 = vadd.f32 %v212, %v217
  %v220 = vrot.slane %v218, 6
  %v222 = vadd.f32 %v119, %v220
  %v223 = vxor.u32 %v222, 2147483648
  %v224 = vmul.f32 %v223, 1.442695
  %v225 = vpow.pop %v224
  %v226 = vadd.f32 %v225, 1.0
  %v227 = vrcp.pop %v226
  %v228 = vmul.f32 1.0, %v227
  %v229 = vtanh.pop %v222
  %v231 = vrot.slane %v200, 6
  %v233 = vmul.f32 %v228, %v231
  %235 = vrot.lane.b32.xlu0 %v229, 124
  %v236 = vpop.permute.xlu0 %235
  %v238 = vmul.f32 %v228, %v236
  %240 = vrot.lane.b32.xlu0 %v238, 2
  %v241 = vpop.permute.xlu0 %240
  %v243 = vadd.f32 %v233, %v241
  %v244 = vtanh.pop %v243
  %246 = vrot.lane.b32.xlu0 %v244, 4
  %v247 = vpop.permute.xlu0 %246
  %v249 = vmul.f32 %v228, %v247
  %251 = vset.pattern.permute.xlu0 6
  %252 = vperm.xlu0 %251, %v249
  %v253 = vpop.permute.xlu0 %252
  %v255 = vmul.f32 %v253, %v131
  %256 = vset.pattern.permute.xlu0 7
  %257 = vperm.xlu0 %256, %v249
  %v258 = vpop.permute.xlu0 %257
  %v260 = vmul.f32 %v258, %v136
  %v261 = vadd.f32 %v255, %v260
  %v263 = vrot.slane %v261, 6
  %v265 = vadd.f32 %v119, %v263
  %v266 = vxor.u32 %v265, 2147483648
  %v267 = vmul.f32 %v266, 1.442695
  %v268 = vpow.pop %v267
  %v269 = vadd.f32 %v268, 1.0
  %v270 = vrcp.pop %v269
  %v271 = vmul.f32 1.0, %v270
  %v272 = vtanh.pop %v265
  %v274 = vrot.slane %v243, 6
  %v276 = vmul.f32 %v271, %v274
  %278 = vrot.lane.b32.xlu0 %v272, 124
  %v279 = vpop.permute.xlu0 %278
  %v281 = vmul.f32 %v271, %v279
  %283 = vrot.lane.b32.xlu0 %v281, 2
  %v284 = vpop.permute.xlu0 %283
  %v286 = vadd.f32 %v276, %v284
  %v287 = vtanh.pop %v286
  %289 = vrot.lane.b32.xlu0 %v287, 4
  %v290 = vpop.permute.xlu0 %289
  %v292 = vmul.f32 %v271, %v290
  %294 = vset.pattern.permute.xlu0 6
  %295 = vperm.xlu0 %294, %v292
  %v296 = vpop.permute.xlu0 %295
  %v298 = vmul.f32 %v296, %v131
  %299 = vset.pattern.permute.xlu0 7
  %300 = vperm.xlu0 %299, %v292
  %v301 = vpop.permute.xlu0 %300
  %v303 = vmul.f32 %v301, %v136
  %v304 = vadd.f32 %v298, %v303
  %v306 = vrot.slane %v304, 6
  %v308 = vadd.f32 %v124, %v306
  %v309 = vxor.u32 %v308, 2147483648
  %v310 = vmul.f32 %v309, 1.442695
  %v311 = vpow.pop %v310
  %v312 = vadd.f32 %v311, 1.0
  %v313 = vrcp.pop %v312
  %v314 = vmul.f32 1.0, %v313
  %v315 = vtanh.pop %v308
  %v317 = vrot.slane %v286, 6
  %v319 = vmul.f32 %v314, %v317
  %321 = vrot.lane.b32.xlu0 %v315, 124
  %v322 = vpop.permute.xlu0 %321
  %v324 = vmul.f32 %v314, %v322
  %326 = vrot.lane.b32.xlu0 %v324, 2
  %v327 = vpop.permute.xlu0 %326
  %v329 = vadd.f32 %v319, %v327
  %v330 = vtanh.pop %v329
  %332 = vrot.lane.b32.xlu0 %v330, 4
  %v333 = vpop.permute.xlu0 %332
  %v335 = vmul.f32 %v314, %v333
  %337 = vset.pattern.permute.xlu0 6
  %338 = vperm.xlu0 %337, %v335
  %v339 = vpop.permute.xlu0 %338
  %v341 = vmul.f32 %v339, %v131
  %342 = vset.pattern.permute.xlu0 7
  %343 = vperm.xlu0 %342, %v335
  %v344 = vpop.permute.xlu0 %343
  %v346 = vmul.f32 %v344, %v136
  %v347 = vadd.f32 %v341, %v346
  %v349 = vrot.slane %v347, 6
  %v351 = vadd.f32 %v124, %v349
  %v352 = vxor.u32 %v351, 2147483648
  %v353 = vmul.f32 %v352, 1.442695
  %v354 = vpow.pop %v353
  %v355 = vadd.f32 %v354, 1.0
  %v356 = vrcp.pop %v355
  %v357 = vmul.f32 1.0, %v356
  %v358 = vtanh.pop %v351
  %v360 = vrot.slane %v329, 6
  %v362 = vmul.f32 %v357, %v360
  %364 = vrot.lane.b32.xlu0 %v358, 124
  %v365 = vpop.permute.xlu0 %364
  %v367 = vmul.f32 %v357, %v365
  %369 = vrot.lane.b32.xlu0 %v367, 2
  %v370 = vpop.permute.xlu0 %369
  %v372 = vadd.f32 %v362, %v370
  %v373 = vtanh.pop %v372
  %375 = vrot.lane.b32.xlu0 %v373, 4
  %v376 = vpop.permute.xlu0 %375
  %v378 = vmul.f32 %v357, %v376
  %380 = vset.pattern.permute.xlu0 6
  %381 = vperm.xlu0 %380, %v378
  %v382 = vpop.permute.xlu0 %381
  %v384 = vmul.f32 %v382, %v131
  %385 = vset.pattern.permute.xlu0 7
  %386 = vperm.xlu0 %385, %v378
  %v387 = vpop.permute.xlu0 %386
  %v389 = vmul.f32 %v387, %v136
  %v390 = vadd.f32 %v384, %v389
  %v392 = vrot.slane %v390, 6
  %v394 = vadd.f32 %v124, %v392
  %v395 = vxor.u32 %v394, 2147483648
  %v396 = vmul.f32 %v395, 1.442695
  %v397 = vpow.pop %v396
  %v398 = vadd.f32 %v397, 1.0
  %v399 = vrcp.pop %v398
  %v400 = vmul.f32 1.0, %v399
  %v401 = vtanh.pop %v394
  %v403 = vrot.slane %v372, 6
  %v405 = vmul.f32 %v400, %v403
  %407 = vrot.lane.b32.xlu0 %v401, 124
  %v408 = vpop.permute.xlu0 %407
  %v410 = vmul.f32 %v400, %v408
  %412 = vrot.lane.b32.xlu0 %v410, 2
  %v413 = vpop.permute.xlu0 %412
  %v415 = vadd.f32 %v405, %v413
  %v416 = vtanh.pop %v415
  %418 = vrot.lane.b32.xlu0 %v416, 4
  %v419 = vpop.permute.xlu0 %418
  %v421 = vmul.f32 %v400, %v419
  %423 = vset.pattern.permute.xlu0 6
  %424 = vperm.xlu0 %423, %v421
  %v425 = vpop.permute.xlu0 %424
  %v427 = vmul.f32 %v425, %v131
  %428 = vset.pattern.permute.xlu0 7
  %429 = vperm.xlu0 %428, %v421
  %v430 = vpop.permute.xlu0 %429
  %v432 = vmul.f32 %v430, %v136
  %v433 = vadd.f32 %v427, %v432
  %v435 = vrot.slane %v433, 6
  %v437 = vadd.f32 %v124, %v435
  %v438 = vxor.u32 %v437, 2147483648
  %v439 = vmul.f32 %v438, 1.442695
  %v440 = vpow.pop %v439
  %v441 = vadd.f32 %v440, 1.0
  %v442 = vrcp.pop %v441
  %v443 = vmul.f32 1.0, %v442
  %v444 = vtanh.pop %v437
  %v446 = vrot.slane %v415, 6
  %v448 = vmul.f32 %v443, %v446
  %450 = vrot.lane.b32.xlu0 %v444, 124
  %v451 = vpop.permute.xlu0 %450
  %v453 = vmul.f32 %v443, %v451
  %455 = vrot.lane.b32.xlu0 %v453, 2
  %v456 = vpop.permute.xlu0 %455
  %v458 = vadd.f32 %v448, %v456
  %v459 = vtanh.pop %v458
  %461 = vrot.lane.b32.xlu0 %v459, 4
  %v462 = vpop.permute.xlu0 %461
  %v464 = vmul.f32 %v443, %v462
  %v465 = vmax.f32 %v464, 0.0
  %v466 = vld [vmem:[%s4] sm:$0x3]
  %v467 = vld [vmem:[%s5] sm:$0x1]
  %v469 = vlaneseq
  %v470 = vshrl.u32 %v469, 7
  %v471 = vsub.s32 0, %v470
  %v472 = vrot.slane %v467, %v471
  %v475 = vrot.slane %v465, 6
  %476 = vrot.lane.b32.xlu0 %v475, 122
  %v477 = vpop.permute.xlu0 %476
  %vm478 = vcmask 15360
  %v479 = vsel %vm478, %v477, 0
  %vm481 = vcmask 1041408
  %v483 = vsel %vm481, %v466, 0
  %485 = vmatprep.subr.mxu0 0.0
  %486 = vmatpush1.msra.mxu0 0.0
  %487 = vmatprep.subr.mxu0 0.0
  %488 = vmatpush1.msra.mxu0 0.0
  %489 = vmatprep.subr.mxu0 0.0
  %490 = vmatpush1.msra.mxu0 0.0
  %491 = vmatprep.subr.mxu0 0.0
  %492 = vmatpush1.msra.mxu0 0.0
  %493 = vmatprep.subr.mxu0 0.0
  %494 = vmatpush1.msra.mxu0 0.0
  %495 = vmatprep.subr.mxu0 0.0
  %496 = vmatpush1.msra.mxu0 0.0
  %497 = vmatprep.subr.mxu0 0.0
  %498 = vmatpush1.msra.mxu0 0.0
  %499 = vmatprep.subr.mxu0 0.0
  %500 = vmatpush1.msra.mxu0 0.0
  %501 = vmatprep.subr.mxu0 0.0
  %502 = vmatpush1.msra.mxu0 0.0
  %503 = vmatprep.subr.mxu0 0.0
  %504 = vmatpush1.msra.mxu0 0.0
  %505 = vmatprep.subr.mxu0 0.0
  %506 = vmatpush1.msra.mxu0 0.0
  %507 = vmatprep.subr.mxu0 0.0
  %508 = vmatpush1.msra.mxu0 0.0
  %509 = vmatprep.subr.mxu0 0.0
  %510 = vmatpush1.msra.mxu0 0.0
  %511 = vmatprep.subr.mxu0 0.0
  %512 = vmatpush1.msra.mxu0 0.0
  %513 = vmatprep.subr.mxu0 0.0
  %514 = vmatpush1.msra.mxu0 0.0
  %515 = vmatprep.subr.mxu0 0.0
  %516 = vmatpush1.msra.mxu0 %v483
  %517 = vmatprep.subr.mxu0 0.0
  %518 = vmatpush2.msra.mxu0 0.0
  %519 = vmatprep.subr.mxu0 0.0
  %520 = vmatpush2.msra.mxu0 0.0
  %521 = vmatprep.subr.mxu0 0.0
  %522 = vmatpush2.msra.mxu0 0.0
  %523 = vmatprep.subr.mxu0 0.0
  %524 = vmatpush2.msra.mxu0 0.0
  %525 = vmatprep.subr.mxu0 0.0
  %526 = vmatpush2.msra.mxu0 0.0
  %527 = vmatprep.subr.mxu0 0.0
  %528 = vmatpush2.msra.mxu0 0.0
  %529 = vmatprep.subr.mxu0 0.0
  %530 = vmatpush2.msra.mxu0 0.0
  %531 = vmatprep.subr.mxu0 0.0
  %532 = vmatpush2.msra.mxu0 0.0
  %533 = vmatprep.subr.mxu0 0.0
  %534 = vmatpush2.msra.mxu0 0.0
  %535 = vmatprep.subr.mxu0 0.0
  %536 = vmatpush2.msra.mxu0 0.0
  %537 = vmatprep.subr.mxu0 0.0
  %538 = vmatpush2.msra.mxu0 0.0
  %539 = vmatprep.subr.mxu0 0.0
  %540 = vmatpush2.msra.mxu0 0.0
  %541 = vmatprep.subr.mxu0 0.0
  %542 = vmatpush2.msra.mxu0 0.0
  %543 = vmatprep.subr.mxu0 0.0
  %544 = vmatpush2.msra.mxu0 0.0
  %545 = vmatprep.subr.mxu0 0.0
  %546 = vmatpush2.msra.mxu0 0.0
  %547 = vmatprep.subr.mxu0 0.0
  %548 = vmatpush2.msra.mxu0 0.0
  %549 = vmatprep.mubr.f32.mxu0 0.0
  %550 = vmatmul.mubr.f32.gmra.mxu0 %v479
  %v551 = vpop.f32.mrf.mxu0
  %v552 = vadd.f32 %v472, %v551
  %v553 = vpop.f32.mrf.mxu0
  %554 = vdwg.mxu0
  %v555 = vmax.f32 %v552, 0.0
  %v556 = vld [vmem:[%s6] sm:$0xff]
  %v557 = vld [vmem:[%s6 + $0x8] sm:$0xff]
  %v558 = vld [vmem:[%s6 + $0x10] sm:$0xff]
  %v559 = vld [vmem:[%s6 + $0x18] sm:$0xff]
  %v560 = vld [vmem:[%s6 + $0x20] sm:$0xff]
  %v561 = vld [vmem:[%s6 + $0x28] sm:$0xff]
  %v562 = vld [vmem:[%s6 + $0x30] sm:$0xff]
  %v563 = vld [vmem:[%s6 + $0x38] sm:$0xff]
  %v564 = vld [vmem:[%s6 + $0x40] sm:$0xff]
  %v565 = vld [vmem:[%s6 + $0x48] sm:$0xff]
  %v566 = vld [vmem:[%s6 + $0x50] sm:$0xff]
  %v567 = vld [vmem:[%s6 + $0x58] sm:$0xff]
  %v568 = vld [vmem:[%s6 + $0x60] sm:$0xff]
  %v569 = vld [vmem:[%s6 + $0x68] sm:$0xff]
  %v570 = vld [vmem:[%s6 + $0x70] sm:$0xff]
  %v571 = vld [vmem:[%s6 + $0x78] sm:$0xff]
  %v572 = vld [vmem:[#allocation2] sm:$0x1]
  %v574 = vlaneseq
  %v575 = vshrl.u32 %v574, 7
  %v576 = vsub.s32 0, %v575
  %v577 = vrot.slane %v572, %v576
  %579 = vmatprep.subr.mxu0 0.0
  %580 = vmatpush1.msra.mxu0 %v571
  %581 = vmatprep.subr.mxu0 0.0
  %582 = vmatpush1.msra.mxu0 %v570
  %583 = vmatprep.subr.mxu0 0.0
  %584 = vmatpush1.msra.mxu0 %v569
  %585 = vmatprep.subr.mxu0 0.0
  %586 = vmatpush1.msra.mxu0 %v568
  %587 = vmatprep.subr.mxu0 0.0
  %588 = vmatpush1.msra.mxu0 %v567
  %589 = vmatprep.subr.mxu0 0.0
  %590 = vmatpush1.msra.mxu0 %v566
  %591 = vmatprep.subr.mxu0 0.0
  %592 = vmatpush1.msra.mxu0 %v565
  %593 = vmatprep.subr.mxu0 0.0
  %594 = vmatpush1.msra.mxu0 %v564
  %595 = vmatprep.subr.mxu0 0.0
  %596 = vmatpush1.msra.mxu0 %v563
  %597 = vmatprep.subr.mxu0 0.0
  %598 = vmatpush1.msra.mxu0 %v562
  %599 = vmatprep.subr.mxu0 0.0
  %600 = vmatpush1.msra.mxu0 %v561
  %601 = vmatprep.subr.mxu0 0.0
  %602 = vmatpush1.msra.mxu0 %v560
  %603 = vmatprep.subr.mxu0 0.0
  %604 = vmatpush1.msra.mxu0 %v559
  %605 = vmatprep.subr.mxu0 0.0
  %606 = vmatpush1.msra.mxu0 %v558
  %607 = vmatprep.subr.mxu0 0.0
  %608 = vmatpush1.msra.mxu0 %v557
  %609 = vmatprep.subr.mxu0 0.0
  %610 = vmatpush1.msra.mxu0 %v556
  %611 = vmatprep.subr.mxu0 0.0
  %612 = vmatpush2.msra.mxu0 0.0
  %613 = vmatprep.subr.mxu0 0.0
  %614 = vmatpush2.msra.mxu0 0.0
  %615 = vmatprep.subr.mxu0 0.0
  %616 = vmatpush2.msra.mxu0 0.0
  %617 = vmatprep.subr.mxu0 0.0
  %618 = vmatpush2.msra.mxu0 0.0
  %619 = vmatprep.subr.mxu0 0.0
  %620 = vmatpush2.msra.mxu0 0.0
  %621 = vmatprep.subr.mxu0 0.0
  %622 = vmatpush2.msra.mxu0 0.0
  %623 = vmatprep.subr.mxu0 0.0
  %624 = vmatpush2.msra.mxu0 0.0
  %625 = vmatprep.subr.mxu0 0.0
  %626 = vmatpush2.msra.mxu0 0.0
  %627 = vmatprep.subr.mxu0 0.0
  %628 = vmatpush2.msra.mxu0 0.0
  %629 = vmatprep.subr.mxu0 0.0
  %630 = vmatpush2.msra.mxu0 0.0
  %631 = vmatprep.subr.mxu0 0.0
  %632 = vmatpush2.msra.mxu0 0.0
  %633 = vmatprep.subr.mxu0 0.0
  %634 = vmatpush2.msra.mxu0 0.0
  %635 = vmatprep.subr.mxu0 0.0
  %636 = vmatpush2.msra.mxu0 0.0
  %637 = vmatprep.subr.mxu0 0.0
  %638 = vmatpush2.msra.mxu0 0.0
  %639 = vmatprep.subr.mxu0 0.0
  %640 = vmatpush2.msra.mxu0 0.0
  %641 = vmatprep.subr.mxu0 0.0
  %642 = vmatpush2.msra.mxu0 0.0
  %643 = vmatprep.mubr.f32.mxu0 0.0
  %644 = vmatmul.mubr.f32.gmra.mxu0 %v555
  %v645 = vpop.f32.mrf.mxu0
  %v646 = vadd.f32 %v577, %v645
  %v647 = vpop.f32.mrf.mxu0
  %648 = vdwg.mxu0
  %vm649 = vcmask 1024
  %650 = vst.msk [vmem:[%s8] sm:$0x3] %vm649, %v646
  // Predicated region
  $region34: #{lstm1_forward.1} parent=0 // pred_check
    _
  $region35: #{lstm1_forward.1} parent=0 // pred_check_branch
    %652 = sbr.rel (0) target = $region37
  $region36: #{lstm1_forward.1} parent=0 // pred_region
    _
  $region37: #{lstm1_forward.1} parent=0 // pred_fallthru
    _
  // Predicated region
  $region38: #{lstm1_forward.1} parent=0 // pred_check
    _
  $region39: #{lstm1_forward.1} parent=0 // pred_check_branch
    %654 = sbr.rel (0) target = $region41
  $region40: #{lstm1_forward.1} parent=0 // pred_region
    _
  $region41: #{lstm1_forward.1} parent=0 // pred_fallthru
    _

</llo_original>
